<compile_context>
chip_gen: v5e
topology: v5e:2x2
jax: 0.10.0
libtpu: 0.0.40
codegen_flags: <defaults>
</compile_context>

<pallas_src>
import jax
import jax.numpy as jnp
from jax.experimental import pallas as pl
from jax.experimental.pallas import tpu as pltpu


def _affine_kernel(w_ref, b_ref, x_ref, o_ref):
    # w_ref / b_ref are (1, 1) f32 scalars in SMEM; x_ref / o_ref are VMEM tiles.
    w = w_ref[0, 0]
    b = b_ref[0, 0]
    o_ref[...] = (x_ref[...].astype(jnp.float32) * w + b).astype(o_ref.dtype)


def _vmem_capacity_bytes():
    """Physical VMEM per TensorCore; conservative 64 MiB (v7x) fallback."""
    try:
        cap = int(getattr(pltpu.get_tpu_info(), "vmem_capacity_bytes", 0))
        if cap > 0:
            return cap
    except Exception:
        pass
    return 64 * 1024 * 1024


def _pick_lane(n_main, packing):
    """Widest lane count (multiple of 128) dividing n_main.

    Prefer a lane that leaves rows a multiple of `packing` and >= 2*packing so
    the row axis can be tiled into >= 2 aligned blocks (pipelined DMA and a
    balanced 2-TensorCore split on v7x)."""
    dividing = [c for c in (1024, 512, 256, 128) if n_main % c == 0]
    for cand in dividing:
        rows = n_main // cand
        if rows % packing == 0 and rows >= 2 * packing:
            return cand
    return dividing[0]


def _pick_tile_rows(rows, packing, max_rows_per_tile):
    """Row-tile that (a) is a multiple of `packing` (sublane alignment),
    (b) divides `rows` exactly (no ragged/masked last block), (c) fits the
    per-tile byte budget, and (d) when possible leaves an even grid of >= 2
    steps so both v7x TensorCores get balanced work."""
    if rows % packing != 0:
        # Rare small/odd shapes: a full-extent block is always legal.
        if rows <= max_rows_per_tile:
            return rows
        return max_rows_per_tile  # ragged last block (masked stores) fallback.
    units = rows // packing
    divisors = sorted(
        {d for i in range(1, int(units ** 0.5) + 1) if units % i == 0
         for d in (i, units // i)})
    fitting = [d * packing for d in divisors if d * packing <= max_rows_per_tile]
    if not fitting:
        return packing
    even_multi = [t for t in fitting if (rows // t) >= 2 and (rows // t) % 2 == 0]
    multi = [t for t in fitting if (rows // t) >= 2]
    for pool in (even_multi, multi, fitting):
        if pool:
            return max(pool)
    return packing


def linear_model_forward(x, weight, bias):
    """out = x * weight + bias  (weight, bias are scalar parameters of shape (1,))."""
    orig_shape = x.shape
    orig_dtype = x.dtype
    n = x.size
    itemsize = jnp.dtype(orig_dtype).itemsize

    w_scalar = jnp.asarray(weight, dtype=jnp.float32).reshape(())
    b_scalar = jnp.asarray(bias, dtype=jnp.float32).reshape(())

    flat = x.reshape(-1)

    # Kernel handles the lane-aligned prefix; the (<128-element) tail is plain
    # JAX.  This replaces the old pad + slice fallback which cost two extra full
    # HBM read+write passes on a purely bandwidth-bound op.
    n_main = n - (n % 128)
    if n_main == 0:
        out_flat = (flat.astype(jnp.float32) * w_scalar + b_scalar).astype(orig_dtype)
        return out_flat.reshape(orig_shape)

    # Sublane packing for the dtype (8 rows/vreg for 4B, 16 for 2B, 32 for 1B).
    packing = 8 * max(1, 4 // itemsize)

    lane = _pick_lane(n_main, packing)
    rows = n_main // lane
    main = flat if n_main == n else flat[:n_main]
    x2d = main.reshape(rows, lane)

    # ~4 MiB tiles: in the measured v6e plateau, inside the 4-6 MiB v7x
    # recommendation, and fine on v5e because we raise vmem_limit_bytes below.
    vmem_cap = _vmem_capacity_bytes()
    target_tile_bytes = min(4 * 1024 * 1024, max(512 * 1024, vmem_cap // 12))
    max_rows_per_tile = max(
        packing, (target_tile_bytes // (lane * itemsize)) // packing * packing)
    tile_rows = _pick_tile_rows(rows, packing, max_rows_per_tile)
    num_tiles = pl.cdiv(rows, tile_rows)
    tile_bytes = tile_rows * lane * itemsize

    # Triple-buffer the input stream once there are enough grid steps to hide
    # in/out DMA descriptor contention; degrade gracefully if this jax version
    # has no BlockSpec.pipeline_mode.
    x_spec = pl.BlockSpec((tile_rows, lane), lambda i: (i, 0))
    in_buffers = 2
    if num_tiles >= 4:
        try:
            x_spec = pl.BlockSpec((tile_rows, lane), lambda i: (i, 0),
                                  pipeline_mode=pl.Buffered(3))
            in_buffers = 3
        except (TypeError, AttributeError):
            pass

    # Explicit scoped-VMEM budget: (input buffers + 2 output buffers) tiles plus
    # headroom, capped well under every generation's physical VMEM.
    vmem_limit = int(min(vmem_cap * 3 // 4,
                         max(16 * 1024 * 1024,
                             (in_buffers + 2) * tile_bytes + 4 * 1024 * 1024)))

    w2d = w_scalar.reshape(1, 1)
    b2d = b_scalar.reshape(1, 1)

    out2d = pl.pallas_call(
        _affine_kernel,
        out_shape=jax.ShapeDtypeStruct((rows, lane), orig_dtype),
        grid=(num_tiles,),
        in_specs=[
            pl.BlockSpec(memory_space=pltpu.MemorySpace.SMEM),
            pl.BlockSpec(memory_space=pltpu.MemorySpace.SMEM),
            x_spec,
        ],
        out_specs=pl.BlockSpec((tile_rows, lane), lambda i: (i, 0)),
        compiler_params=pltpu.CompilerParams(
            dimension_semantics=("parallel",),
            vmem_limit_bytes=vmem_limit,
        ),
        cost_estimate=pl.CostEstimate(
            flops=2 * n_main,
            transcendentals=0,
            bytes_accessed=2 * n_main * itemsize,
        ),
    )(w2d, b2d, x2d)

    out_flat = out2d.reshape(-1)
    if n_main < n:
        tail = flat[n_main:]
        out_tail = (tail.astype(jnp.float32) * w_scalar + b_scalar).astype(orig_dtype)
        out_flat = jnp.concatenate([out_flat, out_tail])
    return out_flat.reshape(orig_shape)


if __name__ == "__main__":
    key = jax.random.PRNGKey(0)
    kx, kw, kb, kx2 = jax.random.split(key, 4)

    # Deterministic parameter init (mirrors torch.randn(1) shapes).
    weight = jax.random.normal(kw, (1,), dtype=jnp.float32)
    bias = jax.random.normal(kb, (1,), dtype=jnp.float32)

    # Small example input consistent with an arbitrary-shaped forward input.
    x = jax.random.normal(kx, (2, 4, 16, 16), dtype=jnp.float32)
    out = jax.block_until_ready(linear_model_forward(x, weight, bias))
    ref = x * weight + bias
    assert out.shape == x.shape
    assert jnp.allclose(out, ref, atol=1e-6, rtol=1e-6)

    # Extra check: non-128-multiple size exercises the lane-aligned main +
    # plain-JAX tail path (no full-array pad/slice copies).
    x2 = jax.random.normal(kx2, (3, 100), dtype=jnp.float32)
    out2 = jax.block_until_ready(linear_model_forward(x2, weight, bias))
    ref2 = x2 * weight + bias
    assert out2.shape == x2.shape
    assert jnp.allclose(out2, ref2, atol=1e-6, rtol=1e-6)

    print("KERNEL_OK")
</pallas_src>

<mosaic_0001>
module attributes {stable_mosaic.version = 11 : i64} {
  func.func @_affine_kernel(%arg0: i32, %arg1: memref<1x1xf32, #tpu.memory_space<smem>>, %arg2: memref<1x1xf32, #tpu.memory_space<smem>>, %arg3: memref<8x128xf32, #tpu.memory_space<vmem>>, %arg4: memref<8x128xf32, #tpu.memory_space<vmem>>) attributes {dimension_semantics = [#tpu.dimension_semantics<parallel>], iteration_bounds = array<i64: 2>, scalar_prefetch = 0 : i64, scratch_operands = 0 : i64, tpu.core_type = #tpu.core_type<tc>, window_params = [{transform_indices = @transform_0, window_bounds = array<i64: 1, 1>}, {transform_indices = @transform_1, window_bounds = array<i64: 1, 1>}, {transform_indices = @transform_2, window_bounds = array<i64: 8, 128>}, {transform_indices = @transform_3, window_bounds = array<i64: 8, 128>}]} {
    %c0 = arith.constant 0 : index
    %c0_0 = arith.constant 0 : index
    %0 = memref.load %arg1[%c0, %c0_0] : memref<1x1xf32, #tpu.memory_space<smem>>
    %c0_1 = arith.constant 0 : index
    %c0_2 = arith.constant 0 : index
    %1 = memref.load %arg2[%c0_1, %c0_2] : memref<1x1xf32, #tpu.memory_space<smem>>
    %c0_3 = arith.constant 0 : index
    %c0_4 = arith.constant 0 : index
    %2 = vector.load %arg3[%c0_3, %c0_4] : memref<8x128xf32, #tpu.memory_space<vmem>>, vector<8x128xf32>
    %3 = vector.broadcast %0 : f32 to vector<8x128xf32>
    %4 = arith.mulf %2, %3 : vector<8x128xf32>
    %5 = vector.broadcast %1 : f32 to vector<8x128xf32>
    %6 = arith.addf %4, %5 : vector<8x128xf32>
    %c0_5 = arith.constant 0 : index
    %c0_6 = arith.constant 0 : index
    %7 = vector.load %arg4[%c0_5, %c0_6] : memref<8x128xf32, #tpu.memory_space<vmem>>, vector<8x128xf32>
    tpu.vector_store %arg4[%c0_5, %c0_6], %6 {strides = array<i32>} : memref<8x128xf32, #tpu.memory_space<vmem>>, vector<8x128xf32>,
    return
  }
  func.func @transform_0(%arg0: i32) -> (i32, i32) {
    %c0_i32 = arith.constant 0 : i32
    %c0_i32_0 = arith.constant 0 : i32
    %c0_i32_1 = arith.constant 0 : i32
    return %c0_i32, %c0_i32_0 : i32, i32
  }
  func.func @transform_1(%arg0: i32) -> (i32, i32) {
    %c0_i32 = arith.constant 0 : i32
    %c0_i32_0 = arith.constant 0 : i32
    %c0_i32_1 = arith.constant 0 : i32
    return %c0_i32, %c0_i32_0 : i32, i32
  }
  func.func @transform_2(%arg0: i32) -> (i32, i32) {
    %c0_i32 = arith.constant 0 : i32
    %c0_i32_0 = arith.constant 0 : i32
    return %arg0, %c0_i32 : i32, i32
  }
  func.func @transform_3(%arg0: i32) -> (i32, i32) {
    %c0_i32 = arith.constant 0 : i32
    %c0_i32_0 = arith.constant 0 : i32
    return %arg0, %c0_i32 : i32, i32
  }
}

</mosaic_0001>

<llo_original>
// kernel: tpu_custom_call.1
$region0: #{tpu_custom_call.1}
  #allocation0 [shape = 'u32[]', space=smem, size = 0x4, offset = 0x4, fixed_abs, tag = 'smem constant byte address 0x4 - core index']
  #allocation1 [shape = 'u32[72,128]{1,0:T(1,128)}', space=vmem, size = 0x9000, scoped, tag = 'internal scratch']
  #allocation2 [shape = 'f32[1,1]{1,0:T(1,128)S(6)}', space=smem, size = 0x200, scoped, tag = 'scoped memory for tpu_custom_call.1']
  #allocation3 [shape = 'f32[1,1]{1,0:T(1,128)S(6)}', space=smem, size = 0x200, scoped, tag = 'scoped memory for tpu_custom_call.1']
  %s0 = inlined_call_operand.<no memory space> [shape: f32[1,1], index: 0, kind: input, shape index: {}]
  %s1 = inlined_call_operand.<no memory space> [shape: f32[1,1], index: 1, kind: input, shape index: {}]
  %s2 = inlined_call_operand.hbm [shape: f32[16,128], index: 2, kind: input, shape index: {}]
  %s3 = inlined_call_operand.hbm [shape: f32[16,128], index: 3, kind: output, shape index: {}]
  %s4 = sld [smem:[#allocation0]]
  $region49: #{tpu_custom_call.1} parent=0
    _
  %s6 = ssub.s32 1, %s4
  %s7 = scalar_select 0, %s6, %s4
  %8 = sst [smem:[#allocation2]] %s0
  %9 = sst [smem:[#allocation3]] %s1
  $region1: #{tpu_custom_call.1} parent=0
    #allocation4 [shape = 'u8[8192]{0}', space=vmem, size = 0x2000, scoped, tag = 'input window, operand 2']
    #allocation5 [shape = 's32[2]{0}', space=sflag, size = 0x8, scoped, tag = 'scoped memory for tpu_custom_call.1']
    #allocation6 [shape = 's32[2]{0}', space=sflag, size = 0x8, scoped, tag = 'scoped memory for tpu_custom_call.1']
    #allocation7 [shape = 'u8[8192]{0}', space=vmem, size = 0x2000, scoped, tag = 'output window, operand 0']
    %10 = vsyncpa [#allocation5], 0
    %s11 = scalar_lea.sflag [#allocation5], 1
    %12 = vsyncpa %s11, 0
    %13 = vsyncpa [#allocation6], 0
    %s14 = scalar_lea.sflag [#allocation6], 1
    %15 = vsyncpa %s14, 0
    loop: start=0, step=1, limit=4
    $region2: #{tpu_custom_call.1} parent=1 // loop_pre_header
      _
    $region3: #{tpu_custom_call.1} parent=1 // loop_header
      %s17 = sphi 0, %s21
      %p18 = scmp.ge.s32.totalorder %s17, 4
      %s25 = sphi 0, %s25
      %s27 = sphi 0, %s25
      %s28 = sphi 0, %s27
      %s42 = sphi 0, %s28
      %s46 = sphi 0, %s46
      %s48 = sphi 0, %s46
      %s49 = sphi 0, %s48
      %s63 = sphi 0, %s49
      %s69 = sphi 0, %s71
      %s72 = sphi 0, %s69
      %s73 = sphi 0, %s72
      %s89 = sphi 0, %s73
      %s95 = sphi 0, %s97
      %s98 = sphi 0, %s95
      %s99 = sphi 0, %s98
      %s115 = sphi 0, %s99
    $region4: #{tpu_custom_call.1} parent=1 // loop_header_branch
      %20 = sbr.rel (%p18) target = $region8
    $region5: #{tpu_custom_call.1} parent=1 // loop_body
      %s22 = ssub.s32 %s17, 1
      %s23 = ssub.s32 %s17, 2
      %s24 = sadd.s32 %s17, 1
      %s26 = sadd.s32 %s25, 1
      %p29 = scmp.eq.s32.totalorder %s17, 1
      %p30 = scmp.ne.s32.totalorder %s25, %s27
      %p31 = scmp.eq.s32.totalorder %s17, 0
      %p32 = por %p30, %p31
      %p33 = scmp.ne.s32.totalorder %s25, %s27
      %p34 = scmp.eq.s32.totalorder %s22, 1
      %p35 = por %p33, %p34
      %p36 = scmp.ne.s32.totalorder %s27, %s28
      %p37 = scmp.eq.s32.totalorder %s22, 0
      %p38 = por %p36, %p37
      %p39 = scmp.ne.s32.totalorder %s27, %s28
      %p40 = scmp.eq.s32.totalorder %s23, 1
      %p41 = por %p39, %p40
      %p43 = scmp.ne.s32.totalorder %s28, %s42
      %p44 = scmp.eq.s32.totalorder %s23, 0
      %p45 = por %p43, %p44
      %s47 = sadd.s32 %s46, 1
      %p50 = scmp.eq.s32.totalorder %s17, 1
      %p51 = scmp.ne.s32.totalorder %s46, %s48
      %p52 = scmp.eq.s32.totalorder %s17, 0
      %p53 = por %p51, %p52
      %p54 = scmp.ne.s32.totalorder %s46, %s48
      %p55 = scmp.eq.s32.totalorder %s22, 1
      %p56 = por %p54, %p55
      %p57 = scmp.ne.s32.totalorder %s48, %s49
      %p58 = scmp.eq.s32.totalorder %s22, 0
      %p59 = por %p57, %p58
      %p60 = scmp.ne.s32.totalorder %s48, %s49
      %p61 = scmp.eq.s32.totalorder %s23, 1
      %p62 = por %p60, %p61
      %p64 = scmp.ne.s32.totalorder %s49, %s63
      %p65 = scmp.eq.s32.totalorder %s23, 0
      %p66 = por %p64, %p65
      %s67 = ssub.s32 %s17, %s24
      %p68 = scmp.eq.s32.totalorder %s67, 0
      %s70 = sadd.s32 %s69, 1
      %s71 = scalar_select %p68, %s69, %s70
      %p74 = pneg %p68
      %p75 = scmp.eq.s32.totalorder %s17, 1
      %p76 = por %p74, %p75
      %p77 = scmp.ne.s32.totalorder %s69, %s72
      %p78 = scmp.eq.s32.totalorder %s17, 0
      %p79 = por %p77, %p78
      %p80 = scmp.ne.s32.totalorder %s69, %s72
      %p81 = scmp.eq.s32.totalorder %s22, 1
      %p82 = por %p80, %p81
      %p83 = scmp.ne.s32.totalorder %s72, %s73
      %p84 = scmp.eq.s32.totalorder %s22, 0
      %p85 = por %p83, %p84
      %p86 = scmp.ne.s32.totalorder %s72, %s73
      %p87 = scmp.eq.s32.totalorder %s23, 1
      %p88 = por %p86, %p87
      %p90 = scmp.ne.s32.totalorder %s73, %s89
      %p91 = scmp.eq.s32.totalorder %s23, 0
      %p92 = por %p90, %p91
      %s93 = ssub.s32 %s17, %s24
      %p94 = scmp.eq.s32.totalorder %s93, 0
      %s96 = sadd.s32 %s95, 1
      %s97 = scalar_select %p94, %s95, %s96
      %p100 = pneg %p94
      %p101 = scmp.eq.s32.totalorder %s17, 1
      %p102 = por %p100, %p101
      %p103 = scmp.ne.s32.totalorder %s95, %s98
      %p104 = scmp.eq.s32.totalorder %s17, 0
      %p105 = por %p103, %p104
      %p106 = scmp.ne.s32.totalorder %s95, %s98
      %p107 = scmp.eq.s32.totalorder %s22, 1
      %p108 = por %p106, %p107
      %p109 = scmp.ne.s32.totalorder %s98, %s99
      %p110 = scmp.eq.s32.totalorder %s22, 0
      %p111 = por %p109, %p110
      %p112 = scmp.ne.s32.totalorder %s98, %s99
      %p113 = scmp.eq.s32.totalorder %s23, 1
      %p114 = por %p112, %p113
      %p116 = scmp.ne.s32.totalorder %s99, %s115
      %p117 = scmp.eq.s32.totalorder %s23, 0
      %p118 = por %p116, %p117
      %p119 = scmp.le.s32.totalorder 1, %s17
      %p120 = scmp.lt.s32.totalorder %s17, 3
      %p121 = pnand %p119, %p120
      %p122 = pneg %p121
      // Predicated region
      $region9: #{tpu_custom_call.1} parent=5 // pred_check
        _
      $region10: #{tpu_custom_call.1} parent=5 // pred_check_branch
        %124 = sbr.rel (%p121) target = $region12
      $region11: #{tpu_custom_call.1} parent=5 // pred_region
        %s125 = ssub.s32 %s17, 1
        // Predicated region
        $region13: #{tpu_custom_call.1} parent=11 // pred_check
          %p126 = pneg %p38
        $region14: #{tpu_custom_call.1} parent=11 // pred_check_branch
          %128 = sbr.rel (%p126) target = $region16
        $region15: #{tpu_custom_call.1} parent=11 // pred_region
          _
        $region16: #{tpu_custom_call.1} parent=11 // pred_fallthru
          _
        // Predicated region
        $region17: #{tpu_custom_call.1} parent=11 // pred_check
          %p129 = pneg %p59
        $region18: #{tpu_custom_call.1} parent=11 // pred_check_branch
          %131 = sbr.rel (%p129) target = $region20
        $region19: #{tpu_custom_call.1} parent=11 // pred_region
          _
        $region20: #{tpu_custom_call.1} parent=11 // pred_fallthru
          _
      $region12: #{tpu_custom_call.1} parent=5 // pred_fallthru
        _
      %p132 = scmp.lt.s32.totalorder %s17, 2
      // Predicated region
      $region21: #{tpu_custom_call.1} parent=5 // pred_check
        %p133 = pneg %p132
      $region22: #{tpu_custom_call.1} parent=5 // pred_check_branch
        %135 = sbr.rel (%p133) target = $region24
      $region23: #{tpu_custom_call.1} parent=5 // pred_region
        // Predicated region
        $region25: #{tpu_custom_call.1} parent=23 // pred_check
          %p136 = pneg %p79
        $region26: #{tpu_custom_call.1} parent=23 // pred_check_branch
          %138 = sbr.rel (%p136) target = $region28
        $region27: #{tpu_custom_call.1} parent=23 // pred_region
          %s139 = sand.u32 %s69, 1
          %s140 = scalar_lea.sflag [#allocation5], %s139
          %s141 = sand.u32 %s69, 1
          %s142 = smul.addr %s141, 8
          %s143 = scalar_lea.vmem [#allocation4], %s142
          %145 = vsyncadd %s140, 0
          %s146 = smul.addr %s17, 8
          %s147 = scalar_lea.hbm %s2, %s146
          %s149 = sshll.u32 %s147, 4
          %s150 = int_to_ptr.hbm [resolvable:$true] %s149
          %s151 = sshll.u32 %s143, 4
          %s152 = int_to_ptr.vmem [resolvable:$true] %s151
          %154 = dma.hbm_to_vmem [thread:$0]  %s150, 128, %s152, %s140
        $region28: #{tpu_custom_call.1} parent=23 // pred_fallthru
          _
      $region24: #{tpu_custom_call.1} parent=5 // pred_fallthru
        _
      %p155 = scmp.le.s32.totalorder 1, %s17
      %p156 = scmp.lt.s32.totalorder %s17, 3
      %p157 = pnand %p155, %p156
      %p158 = pneg %p157
      // Predicated region
      $region29: #{tpu_custom_call.1} parent=5 // pred_check
        _
      $region30: #{tpu_custom_call.1} parent=5 // pred_check_branch
        %160 = sbr.rel (%p157) target = $region32
      $region31: #{tpu_custom_call.1} parent=5 // pred_region
        %s161 = ssub.s32 %s17, 1
        %s162 = sand.u32 %s72, 1
        %s163 = scalar_lea.sflag [#allocation5], %s162
        %s164 = sand.u32 %s72, 1
        %s165 = smul.addr %s164, 8
        %s166 = scalar_lea.vmem [#allocation4], %s165
        // Predicated region
        $region33: #{tpu_custom_call.1} parent=31 // pred_check
          %p167 = pneg %p85
        $region34: #{tpu_custom_call.1} parent=31 // pred_check_branch
          %169 = sbr.rel (%p167) target = $region36
        $region35: #{tpu_custom_call.1} parent=31 // pred_region
          %171 = dma.done %s163, 128
        $region36: #{tpu_custom_call.1} parent=31 // pred_fallthru
          _
        %p172 = pneg %p38
        %p173 = pneg %p35
        %p174 = pneg %p59
        %p175 = pneg %p56
        %s176 = sand.u32 %s72, 1
        %s177 = scalar_lea.sflag [#allocation5], %s176
        %s178 = sand.u32 %s72, 1
        %s179 = smul.addr %s178, 8
        %s180 = scalar_lea.vmem [#allocation4], %s179
        %p181 = pneg %p85
        %p182 = pneg %p82
        %p183 = pneg %p111
        %p184 = pneg %p108
        %s185 = sand.u32 %s98, 1
        %s186 = scalar_lea.sflag [#allocation6], %s185
        %s187 = sand.u32 %s98, 1
        %s188 = smul.addr %s187, 8
        %s189 = scalar_lea.vmem [#allocation7], %s188
        %s190 = sld [smem:[#allocation2]]
        %s191 = sld [smem:[#allocation3]]
        %v192 = vld [vmem:[%s166] sm:$0xff]
        %v193 = vstv %s190
        %v194 = vmul.f32 %v192, %v193
        %v195 = vstv %s191
        %v196 = vadd.f32 %v194, %v195
        %197 = vst [vmem:[%s189] sm:$0xff] %v196
        %s198 = sand.u32 %s98, 1
        %s199 = scalar_lea.sflag [#allocation6], %s198
        %s200 = sand.u32 %s98, 1
        %s201 = smul.addr %s200, 8
        %s202 = scalar_lea.vmem [#allocation7], %s201
        // Predicated region
        $region37: #{tpu_custom_call.1} parent=31 // pred_check
          %p203 = pneg %p108
        $region38: #{tpu_custom_call.1} parent=31 // pred_check_branch
          %205 = sbr.rel (%p203) target = $region40
        $region39: #{tpu_custom_call.1} parent=31 // pred_region
          %207 = vsyncadd %s199, 0
          %s208 = smul.addr %s22, 8
          %s209 = scalar_lea.hbm %s3, %s208
          %s211 = sshll.u32 %s202, 4
          %s212 = int_to_ptr.vmem [resolvable:$true] %s211
          %s213 = sshll.u32 %s209, 4
          %s214 = int_to_ptr.hbm [resolvable:$true] %s213
          %216 = dma.vmem_to_hbm [thread:$0]  %s212, 128, %s214, %s199
        $region40: #{tpu_custom_call.1} parent=31 // pred_fallthru
          _
      $region32: #{tpu_custom_call.1} parent=5 // pred_fallthru
        _
      %p217 = scmp.le.s32.totalorder 2, %s17
      // Predicated region
      $region41: #{tpu_custom_call.1} parent=5 // pred_check
        %p218 = pneg %p217
      $region42: #{tpu_custom_call.1} parent=5 // pred_check_branch
        %220 = sbr.rel (%p218) target = $region44
      $region43: #{tpu_custom_call.1} parent=5 // pred_region
        %s221 = ssub.s32 %s17, 2
        // Predicated region
        $region45: #{tpu_custom_call.1} parent=43 // pred_check
          %p222 = pneg %p114
        $region46: #{tpu_custom_call.1} parent=43 // pred_check_branch
          %224 = sbr.rel (%p222) target = $region48
        $region47: #{tpu_custom_call.1} parent=43 // pred_region
          %s225 = sand.u32 %s99, 1
          %s226 = scalar_lea.sflag [#allocation6], %s225
          %s227 = sand.u32 %s99, 1
          %s228 = smul.addr %s227, 8
          %s229 = scalar_lea.vmem [#allocation7], %s228
          %231 = dma.done %s226, 128
        $region48: #{tpu_custom_call.1} parent=43 // pred_fallthru
          _
      $region44: #{tpu_custom_call.1} parent=5 // pred_fallthru
        _
    $region6: #{tpu_custom_call.1} parent=1 // loop_footer
      %s21 = sadd.s32 1, %s17
    $region7: #{tpu_custom_call.1} parent=1 // loop_footer_branch
      %16 = sbr.rel target = $region3
    $region8: #{tpu_custom_call.1} parent=1 // loop_exit
      _
    %232 = vsyncpa [#allocation5], 1
    %s233 = scalar_lea.sflag [#allocation5], 1
    %234 = vsyncpa %s233, 1
    %235 = vsyncpa [#allocation6], 1
    %s236 = scalar_lea.sflag [#allocation6], 1
    %237 = vsyncpa %s236, 1

</llo_original>
